<compile_context>
chip_gen: v5e
topology: v5e:2x2
jax: 0.10.0
libtpu: 0.0.40
codegen_flags: <defaults>
</compile_context>

<pallas_src>
import functools

import numpy as np
import jax
import jax.numpy as jnp
from jax import lax
from jax.experimental import pallas as pl
from jax.experimental.pallas import tpu as pltpu


def _round_up(x, m):
    return ((x + m - 1) // m) * m


def _triplet_loss_kernel(tri_ref, et_hbm, part_ref, et_ref, w1_ref, w2_ref,
                         *, margin, d_pad):
    """Grid = (num_split, tiles_per_split); one step = (3, TILE_T) triplet tile.

    tri_ref : (3, TILE_T) int32      anchor / positive / negative row indices
    et_hbm  : (D_pad, N_pad) f32     embeddings^T, raw HBM ref (pl.ANY)
    part_ref: (1, TILE_T) f32        per-split lane-wise partial loss sums
    et_ref  : (D_pad, N_pad) f32     scratch: E^T staged in VMEM
    w1_ref  : (D_pad+8, N_pad) f32   scratch: [E^T ; ones ; zeros]
    w2_ref  : (D_pad+8, N_pad) f32   scratch: [-2*E^T ; sq-norms ; zeros]
    """
    i = pl.program_id(1)
    n_pad = et_ref.shape[1]
    tile_t = tri_ref.shape[1]

    # ---- one-time (per core) setup: DMA E^T, build augmented W1 / W2 --------
    @pl.when(i == 0)
    def _():
        pltpu.sync_copy(et_hbm, et_ref)                     # HBM -> VMEM, once
        et = et_ref[...]
        sq = jnp.sum(et * et, axis=0, keepdims=True)        # (1, N_pad) ||e_j||^2
        w1_ref[pl.ds(0, d_pad), :] = et
        w2_ref[pl.ds(0, d_pad), :] = -2.0 * et
        row = lax.broadcasted_iota(jnp.int32, (8, n_pad), 0)
        w1_ref[pl.ds(d_pad, 8), :] = (row == 0).astype(jnp.float32)
        w2_ref[pl.ds(d_pad, 8), :] = jnp.where(row == 0, sq, jnp.float32(0.0))
        part_ref[...] = jnp.zeros_like(part_ref)

    # ---- per-tile: two D-sized gather matmuls + minimal epilogue ------------
    iota_n = lax.broadcasted_iota(jnp.int32, (n_pad, tile_t), 0)
    oh_a = (iota_n == tri_ref[0:1, :]).astype(jnp.float32)           # (N_pad, Tt)
    oh_pn = ((iota_n == tri_ref[1:2, :]).astype(jnp.float32)
             - (iota_n == tri_ref[2:3, :]).astype(jnp.float32))      # (N_pad, Tt)

    # column t of a_cols : [e_a ; 1 ; 0]
    # column t of pn_cols: [-2*(e_p - e_n) ; ||p||^2 - ||n||^2 ; 0]
    a_cols = jnp.dot(w1_ref[...], oh_a, preferred_element_type=jnp.float32)
    pn_cols = jnp.dot(w2_ref[...], oh_pn, preferred_element_type=jnp.float32)

    # sum over rows = -2<a, p-n> + ||p||^2 - ||n||^2 = d_ap - d_an
    diff = jnp.sum(a_cols * pn_cols, axis=0, keepdims=True)          # (1, Tt)
    part_ref[...] += jnp.maximum(diff + jnp.float32(margin), 0.0)    # F.relu, accum


def _all_triplets(labels):
    """Vectorized 'AllTripletSelector': every (a, p, n) with
    label[a] == label[p], a != p, label[n] != label[a]."""
    labels = np.asarray(labels).reshape(-1)
    same = labels[:, None] == labels[None, :]
    np.fill_diagonal(same, False)
    a_idx, p_idx = np.nonzero(same)
    if a_idx.size == 0:
        return np.zeros((0, 3), np.int32)
    neg_mask = labels[a_idx][:, None] != labels[None, :]
    pair_id, n_idx = np.nonzero(neg_mask)
    trips = np.stack([a_idx[pair_id], p_idx[pair_id], n_idx], axis=1)
    return trips.astype(np.int32)


def _vmem_capacity_bytes():
    try:
        return int(pltpu.get_tpu_info().vmem_capacity_bytes)
    except Exception:
        return 64 * 2**20          # conservative default (v7x per-TC VMEM)


def _pick_tile_t(n_pad, d_pad, num_triplets, vmem_cap):
    """TILE_T: multiple of 128, sized from this generation's VMEM capacity."""
    per_col = 4 * (4 * n_pad + 3 * (d_pad + 8))   # live bytes per triplet column
    budget = max(6 * 2**20, vmem_cap // 6)
    cap = max(128, (budget // per_col) // 128 * 128)
    hard_cap = 8192 if vmem_cap >= 96 * 2**20 else 4096
    need = _round_up(max(num_triplets, 1), 128)
    return int(min(cap, need, hard_cap))


def online_triplet_loss(embeddings, labels, margin=1.0, tile_t=None):
    """Returns (mean_loss, num_triplets), matching OnlineTripletLoss.forward."""
    triplets = _all_triplets(labels)                      # host-side selector
    T = int(triplets.shape[0])
    assert T > 0, "no valid triplets for given labels"

    emb = np.asarray(embeddings, np.float32)
    N, D = emb.shape
    n_pad = _round_up(N, 128)
    d_pad = _round_up(D, 128)

    vmem_cap = _vmem_capacity_bytes()
    if tile_t is None:
        tile_t = _pick_tile_t(n_pad, d_pad, T, vmem_cap)

    tiles = -(-T // tile_t)
    num_split = 2 if tiles >= 2 else 1                    # v7x: 2 TCs; else harmless
    tiles = _round_up(tiles, num_split)
    tiles_per_split = tiles // num_split
    tp = tiles * tile_t

    # Padded data: E^T laid out (D_pad, N_pad); padded triplet columns are
    # (0,0,0) and each contributes exactly max(margin, 0) -> fixed in wrapper.
    et_pad = np.zeros((d_pad, n_pad), np.float32)
    et_pad[:D, :N] = emb.T
    tri_t = np.zeros((3, tp), np.int32)                   # lane-dense layout
    tri_t[:, :T] = triplets.T

    tri_dev = jnp.asarray(tri_t)
    et_dev = jnp.asarray(et_pad)

    kernel = functools.partial(_triplet_loss_kernel,
                               margin=float(margin), d_pad=int(d_pad))

    # VMEM budget: E^T stage + W1 + W2 scratch, pipelined index tiles, per-tile
    # intermediates, lane-dense output block.
    fixed = 4 * (d_pad * n_pad + 2 * (d_pad + 8) * n_pad)
    per_tile = 4 * (4 * n_pad + 3 * (d_pad + 8) + 4) * tile_t
    tri_buf = 2 * 4 * 8 * tile_t
    est = fixed + per_tile + tri_buf
    vmem_limit = int(min(max(int(1.5 * est), 32 * 2**20),
                         max(32 * 2**20, vmem_cap - 16 * 2**20)))

    flops = 4 * (d_pad + 8) * n_pad * tp + 2 * d_pad * n_pad
    bytes_accessed = 4 * 8 * tp + 4 * d_pad * n_pad + 4 * num_split * tile_t

    partials = pl.pallas_call(
        kernel,
        out_shape=jax.ShapeDtypeStruct((1, num_split * tile_t), jnp.float32),
        grid_spec=pltpu.PrefetchScalarGridSpec(
            num_scalar_prefetch=0,
            grid=(num_split, tiles_per_split),
            in_specs=[
                # triplet index tile, lane-dense, pipelined/double-buffered
                pl.BlockSpec((3, tile_t),
                             lambda c, i: (0, c * tiles_per_split + i)),
                # embeddings^T stay in HBM; DMA'd once per core at i == 0
                pl.BlockSpec(memory_space=pl.ANY),
            ],
            out_specs=pl.BlockSpec((1, tile_t), lambda c, i: (0, c)),
            scratch_shapes=[
                pltpu.VMEM((d_pad, n_pad), jnp.float32),        # E^T staging
                pltpu.VMEM((d_pad + 8, n_pad), jnp.float32),    # W1
                pltpu.VMEM((d_pad + 8, n_pad), jnp.float32),    # W2
            ],
        ),
        compiler_params=pltpu.CompilerParams(
            dimension_semantics=("parallel", "arbitrary"),
            vmem_limit_bytes=vmem_limit,
        ),
        cost_estimate=pl.CostEstimate(
            flops=int(flops), transcendentals=0,
            bytes_accessed=int(bytes_accessed)),
    )(tri_dev, et_dev)

    # Padded (0,0,0) triplets each contributed max(margin, 0); remove them,
    # then take the mean over the true triplet count.
    pad_corr = (tp - T) * max(float(margin), 0.0)
    loss = (jnp.sum(partials) - jnp.float32(pad_corr)) / jnp.float32(T)
    return loss, T


def _reference(embeddings_np, triplets, margin):
    e = np.asarray(embeddings_np, np.float32)
    a, p, n = triplets[:, 0], triplets[:, 1], triplets[:, 2]
    ap = np.sum((e[a] - e[p]) ** 2, axis=1)
    an = np.sum((e[a] - e[n]) ** 2, axis=1)
    losses = np.maximum(ap - an + margin, 0.0)
    return float(losses.mean())


if __name__ == "__main__":
    # Small deterministic example: batch=16 embeddings of hidden=32,
    # 4 classes with 4 samples each -> 576 triplets.  With TILE_T=128 this is
    # 6 padded tiles split 2-way (3 tiles per split), exercising multi-tile
    # accumulation, the padded-column correction, and the parallel outer axis.
    key = jax.random.PRNGKey(0)
    N, D = 16, 32
    embeddings = jax.random.normal(key, (N, D), dtype=jnp.float32)
    labels = np.repeat(np.arange(4, dtype=np.int32), 4)
    margin = 1.0

    loss, n_triplets = online_triplet_loss(embeddings, labels, margin, tile_t=128)
    loss = jax.block_until_ready(loss)

    trips = _all_triplets(labels)
    assert n_triplets == trips.shape[0], (n_triplets, trips.shape[0])
    ref = _reference(np.asarray(embeddings), trips, margin)
    assert np.allclose(float(loss), ref, rtol=1e-3, atol=1e-3), (float(loss), ref)

    print("KERNEL_OK")
</pallas_src>

<mosaic_0001>
module attributes {stable_mosaic.version = 11 : i64} {
  func.func @_triplet_loss_kernel(%arg0: i32, %arg1: i32, %arg2: memref<3x128xi32, #tpu.memory_space<vmem>>, %arg3: memref<128x128xf32, #tpu.memory_space<any>>, %arg4: memref<1x128xf32, #tpu.memory_space<vmem>>, %arg5: memref<128x128xf32, #tpu.memory_space<vmem>>, %arg6: memref<136x128xf32, #tpu.memory_space<vmem>>, %arg7: memref<136x128xf32, #tpu.memory_space<vmem>>) attributes {dimension_semantics = [#tpu.dimension_semantics<parallel>, #tpu.dimension_semantics<arbitrary>], iteration_bounds = array<i64: 2, 3>, scalar_prefetch = 0 : i64, scratch_operands = 3 : i64, tpu.core_type = #tpu.core_type<tc>, window_params = [{transform_indices = @transform_0, window_bounds = array<i64: 3, 128>}, {}, {transform_indices = @transform_2, window_bounds = array<i64: 1, 128>}]} {
    %c0_i32 = arith.constant 0 : i32
    %0 = arith.cmpi eq, %arg1, %c0_i32 : i32
    %1 = arith.extui %0 : i1 to i32
    %c0_i32_0 = arith.constant 0 : i32
    %2 = arith.cmpi ne, %1, %c0_i32_0 : i32
    scf.if %2 {
      "tpu.region"() ({
        %57 = tpu.sem_alloc : memref<!tpu.dma_semaphore, #tpu.memory_space<semaphore_mem>>
        tpu.enqueue_dma source(%arg3 : memref<128x128xf32, #tpu.memory_space<any>>) target(%arg5 : memref<128x128xf32, #tpu.memory_space<vmem>>) target_semaphore(%57 : memref<!tpu.dma_semaphore, #tpu.memory_space<semaphore_mem>>)
        tpu.wait_dma2 semaphore(%57 : memref<!tpu.dma_semaphore, #tpu.memory_space<semaphore_mem>>) src(%arg3 : memref<128x128xf32, #tpu.memory_space<any>>) dst(%arg5 : memref<128x128xf32, #tpu.memory_space<vmem>>)
        tpu.yield
      }) : () -> ()
      %c0_16 = arith.constant 0 : index
      %c0_17 = arith.constant 0 : index
      %34 = vector.load %arg5[%c0_16, %c0_17] : memref<128x128xf32, #tpu.memory_space<vmem>>, vector<128x128xf32>
      %35 = arith.mulf %34, %34 : vector<128x128xf32>
      %cst_18 = arith.constant dense<0.000000e+00> : vector<128xf32>
      %36 = vector.multi_reduction <add>, %35, %cst_18 [0] : vector<128x128xf32> to vector<128xf32>
      %37 = vector.shape_cast %36 : vector<128xf32> to vector<1x128xf32>
      %c0_19 = arith.constant 0 : index
      %c0_20 = arith.constant 0 : index
      %38 = vector.load %arg6[%c0_19, %c0_20] : memref<136x128xf32, #tpu.memory_space<vmem>>, vector<128x128xf32>
      tpu.vector_store %arg6[%c0_19, %c0_20], %34 {strides = array<i32>} : memref<136x128xf32, #tpu.memory_space<vmem>>, vector<128x128xf32>,
      %cst_21 = arith.constant -2.000000e+00 : f32
      %39 = vector.broadcast %cst_21 : f32 to vector<128x128xf32>
      %40 = arith.mulf %39, %34 : vector<128x128xf32>
      %c0_22 = arith.constant 0 : index
      %c0_23 = arith.constant 0 : index
      %41 = vector.load %arg7[%c0_22, %c0_23] : memref<136x128xf32, #tpu.memory_space<vmem>>, vector<128x128xf32>
      tpu.vector_store %arg7[%c0_22, %c0_23], %40 {strides = array<i32>} : memref<136x128xf32, #tpu.memory_space<vmem>>, vector<128x128xf32>,
      %42 = tpu.iota {dimensions = array<i32: 0>} : vector<8x128xi32>
      %c0_i32_24 = arith.constant 0 : i32
      %43 = vector.broadcast %c0_i32_24 : i32 to vector<8x128xi32>
      %44 = arith.cmpi eq, %42, %43 : vector<8x128xi32>
      %45 = arith.extui %44 : vector<8x128xi1> to vector<8x128xi32>
      %46 = arith.sitofp %45 : vector<8x128xi32> to vector<8x128xf32>
      %c128 = arith.constant 128 : index
      %c0_25 = arith.constant 0 : index
      %47 = vector.load %arg6[%c128, %c0_25] : memref<136x128xf32, #tpu.memory_space<vmem>>, vector<8x128xf32>
      tpu.vector_store %arg6[%c128, %c0_25], %46 {strides = array<i32>} : memref<136x128xf32, #tpu.memory_space<vmem>>, vector<8x128xf32>,
      %c0_i32_26 = arith.constant 0 : i32
      %48 = vector.broadcast %c0_i32_26 : i32 to vector<8x128xi32>
      %49 = arith.cmpi eq, %42, %48 : vector<8x128xi32>
      %cst_27 = arith.constant 0.000000e+00 : f32
      %50 = vector.shape_cast %37 : vector<1x128xf32> to vector<1x128xf32>
      %51 = vector.broadcast %50 : vector<1x128xf32> to vector<8x128xf32>
      %52 = vector.broadcast %cst_27 : f32 to vector<8x128xf32>
      %53 = arith.select %49, %51, %52 : vector<8x128xi1>, vector<8x128xf32>
      %c128_28 = arith.constant 128 : index
      %c0_29 = arith.constant 0 : index
      %54 = vector.load %arg7[%c128_28, %c0_29] : memref<136x128xf32, #tpu.memory_space<vmem>>, vector<8x128xf32>
      tpu.vector_store %arg7[%c128_28, %c0_29], %53 {strides = array<i32>} : memref<136x128xf32, #tpu.memory_space<vmem>>, vector<8x128xf32>,
      %cst_30 = arith.constant 0.000000e+00 : f32
      %55 = vector.broadcast %cst_30 : f32 to vector<1x128xf32>
      %c0_31 = arith.constant 0 : index
      %c0_32 = arith.constant 0 : index
      %56 = vector.load %arg4[%c0_31, %c0_32] : memref<1x128xf32, #tpu.memory_space<vmem>>, vector<1x128xf32>
      tpu.vector_store %arg4[%c0_31, %c0_32], %55 {strides = array<i32>} : memref<1x128xf32, #tpu.memory_space<vmem>>, vector<1x128xf32>,
    } else {
    }
    %3 = tpu.iota {dimensions = array<i32: 0>} : vector<128x128xi32>
    %c0 = arith.constant 0 : index
    %c0_1 = arith.constant 0 : index
    %4 = vector.load %arg2[%c0, %c0_1] : memref<3x128xi32, #tpu.memory_space<vmem>>, vector<1x128xi32>
    %5 = vector.broadcast %4 : vector<1x128xi32> to vector<128x128xi32>
    %6 = arith.cmpi eq, %3, %5 : vector<128x128xi32>
    %7 = arith.extui %6 : vector<128x128xi1> to vector<128x128xi32>
    %8 = arith.sitofp %7 : vector<128x128xi32> to vector<128x128xf32>
    %c1 = arith.constant 1 : index
    %c0_2 = arith.constant 0 : index
    %9 = vector.load %arg2[%c1, %c0_2] : memref<3x128xi32, #tpu.memory_space<vmem>>, vector<1x128xi32>
    %10 = vector.broadcast %9 : vector<1x128xi32> to vector<128x128xi32>
    %11 = arith.cmpi eq, %3, %10 : vector<128x128xi32>
    %12 = arith.extui %11 : vector<128x128xi1> to vector<128x128xi32>
    %13 = arith.sitofp %12 : vector<128x128xi32> to vector<128x128xf32>
    %c2 = arith.constant 2 : index
    %c0_3 = arith.constant 0 : index
    %14 = vector.load %arg2[%c2, %c0_3] : memref<3x128xi32, #tpu.memory_space<vmem>>, vector<1x128xi32>
    %15 = vector.broadcast %14 : vector<1x128xi32> to vector<128x128xi32>
    %16 = arith.cmpi eq, %3, %15 : vector<128x128xi32>
    %17 = arith.extui %16 : vector<128x128xi1> to vector<128x128xi32>
    %18 = arith.sitofp %17 : vector<128x128xi32> to vector<128x128xf32>
    %19 = arith.subf %13, %18 : vector<128x128xf32>
    %c0_4 = arith.constant 0 : index
    %c0_5 = arith.constant 0 : index
    %20 = vector.load %arg6[%c0_4, %c0_5] : memref<136x128xf32, #tpu.memory_space<vmem>>, vector<136x128xf32>
    %cst = arith.constant dense<0.000000e+00> : vector<136x128xf32>
    %21 = tpu.matmul %20, %8, %cst {dimension_numbers = #tpu.dot_dimension_numbers<[1], [0], [0], [1], [0, 0, 1, 1], [], []>} : vector<136x128xf32>, vector<128x128xf32>, vector<136x128xf32> -> vector<136x128xf32>
    %c0_6 = arith.constant 0 : index
    %c0_7 = arith.constant 0 : index
    %22 = vector.load %arg7[%c0_6, %c0_7] : memref<136x128xf32, #tpu.memory_space<vmem>>, vector<136x128xf32>
    %cst_8 = arith.constant dense<0.000000e+00> : vector<136x128xf32>
    %23 = tpu.matmul %22, %19, %cst_8 {dimension_numbers = #tpu.dot_dimension_numbers<[1], [0], [0], [1], [0, 0, 1, 1], [], []>} : vector<136x128xf32>, vector<128x128xf32>, vector<136x128xf32> -> vector<136x128xf32>
    %24 = arith.mulf %21, %23 : vector<136x128xf32>
    %cst_9 = arith.constant dense<0.000000e+00> : vector<128xf32>
    %25 = vector.multi_reduction <add>, %24, %cst_9 [0] : vector<136x128xf32> to vector<128xf32>
    %26 = vector.shape_cast %25 : vector<128xf32> to vector<1x128xf32>
    %c0_10 = arith.constant 0 : index
    %c0_11 = arith.constant 0 : index
    %27 = vector.load %arg4[%c0_10, %c0_11] : memref<1x128xf32, #tpu.memory_space<vmem>>, vector<1x128xf32>
    %cst_12 = arith.constant 1.000000e+00 : f32
    %28 = vector.broadcast %cst_12 : f32 to vector<1x128xf32>
    %29 = arith.addf %26, %28 : vector<1x128xf32>
    %cst_13 = arith.constant 0.000000e+00 : f32
    %30 = vector.broadcast %cst_13 : f32 to vector<1x128xf32>
    %31 = arith.maximumf %29, %30 : vector<1x128xf32>
    %32 = arith.addf %27, %31 : vector<1x128xf32>
    %c0_14 = arith.constant 0 : index
    %c0_15 = arith.constant 0 : index
    %33 = vector.load %arg4[%c0_14, %c0_15] : memref<1x128xf32, #tpu.memory_space<vmem>>, vector<1x128xf32>
    tpu.vector_store %arg4[%c0_14, %c0_15], %32 {strides = array<i32>} : memref<1x128xf32, #tpu.memory_space<vmem>>, vector<1x128xf32>,
    return
  }
  func.func @transform_0(%arg0: i32, %arg1: i32) -> (i32, i32) {
    %c3_i32 = arith.constant 3 : i32
    %0 = arith.muli %arg0, %c3_i32 : i32
    %1 = arith.addi %0, %arg1 : i32
    %c0_i32 = arith.constant 0 : i32
    %c0_i32_0 = arith.constant 0 : i32
    return %c0_i32, %1 : i32, i32
  }
  func.func @transform_2(%arg0: i32, %arg1: i32) -> (i32, i32) {
    %c0_i32 = arith.constant 0 : i32
    %c0_i32_0 = arith.constant 0 : i32
    return %c0_i32, %arg0 : i32, i32
  }
}

</mosaic_0001>

<llo_original>
// kernel: tpu_custom_call.1
$region0: #{tpu_custom_call.1}
  #allocation0 [shape = 'u32[]', space=smem, size = 0x4, offset = 0x4, fixed_abs, tag = 'smem constant byte address 0x4 - core index']
  #allocation1 [shape = 'u32[72,128]{1,0:T(1,128)}', space=vmem, size = 0x9000, scoped, tag = 'internal scratch']
  #allocation2 [shape = 'f32[128,128]{1,0:T(8,128)}', space=vmem, size = 0x10000, scoped, tag = 'scratch operand']
  #allocation3 [shape = 'f32[136,128]{1,0:T(8,128)}', space=vmem, size = 0x11000, scoped, tag = 'scratch operand']
  #allocation4 [shape = 'f32[136,128]{1,0:T(8,128)}', space=vmem, size = 0x11000, scoped, tag = 'scratch operand']
  #allocation10 [shape = 's32[]', space=sflag, size = 0x4, offset = 0, fixed_abs, tag = 'sflag constant byte address 0x0 - dummy sync flag']
  #allocation11 [shape = 's32[]', space=sflag, size = 0x4, offset = 0, fixed_abs, tag = 'sflag constant byte address 0x0 - dummy sync flag']
  #allocation12 [shape = 'u32[]', space=smem, size = 0x4, offset = 0x44, fixed_abs, tag = 'smem constant byte address 0x44 - assertion arg 0']
  #allocation13 [shape = 'u32[]', space=smem, size = 0x4, offset = 0x48, fixed_abs, tag = 'smem constant byte address 0x48 - assertion arg 1']
  %s0 = inlined_call_operand.hbm [shape: s32[3,768], index: 0, kind: input, shape index: {}]
  %s1 = inlined_call_operand.hbm [shape: f32[128,128], index: 1, kind: input, shape index: {}]
  %s2 = inlined_call_operand.hbm [shape: f32[1,256], index: 2, kind: output, shape index: {}]
  %s3 = sld [smem:[#allocation0]]
  $region50: #{tpu_custom_call.1} parent=0
    _
  %s5 = ssub.s32 1, %s3
  %s6 = scalar_select 0, %s5, %s3
  $region1: #{tpu_custom_call.1} parent=0
    #allocation5 [shape = 'u8[4096]{0}', space=vmem, size = 0x1000, scoped, tag = 'input window, operand 0']
    #allocation6 [shape = 's32[2]{0}', space=sflag, size = 0x8, scoped, tag = 'scoped memory for tpu_custom_call.1']
    #allocation7 [shape = 's32[2]{0}', space=sflag, size = 0x8, scoped, tag = 'scoped memory for tpu_custom_call.1']
    #allocation8 [shape = 'u8[1024]{0}', space=vmem, size = 0x400, scoped, tag = 'output window, operand 0']
    %7 = vsyncpa [#allocation6], 0
    %s8 = scalar_lea.sflag [#allocation6], 1
    %9 = vsyncpa %s8, 0
    %10 = vsyncpa [#allocation7], 0
    %s11 = scalar_lea.sflag [#allocation7], 1
    %12 = vsyncpa %s11, 0
    loop: start=0, step=1, limit=8
    $region2: #{tpu_custom_call.1} parent=1 // loop_pre_header
      _
    $region3: #{tpu_custom_call.1} parent=1 // loop_header
      %s14 = sphi 0, %s18
      %p15 = scmp.ge.s32.totalorder %s14, 8
      %s21 = sphi 0, %s33
      %s22 = sphi 0, %s29
      %s23 = sphi 0, %s21
      %s24 = sphi 0, %s22
      %s25 = sphi 0, %s23
      %s26 = sphi 0, %s24
      %s40 = sphi 0, %s42
      %s43 = sphi 0, %s40
      %s44 = sphi 0, %s43
      %s60 = sphi 0, %s44
      %s66 = sphi 0, %s68
      %s69 = sphi 0, %s66
      %s70 = sphi 0, %s69
      %s86 = sphi 0, %s70
    $region4: #{tpu_custom_call.1} parent=1 // loop_header_branch
      %17 = sbr.rel (%p15) target = $region8
    $region5: #{tpu_custom_call.1} parent=1 // loop_body
      %s19 = ssub.s32 %s14, 1
      %s20 = ssub.s32 %s14, 2
      %s27 = sadd.s32 1, %s22
      %p28 = scmp.ge.s32.totalorder %s27, 3
      %s29 = scalar_select %p28, 0, %s27
      %s30 = sadd.s32 1, %s21
      %s31 = scalar_select %p28, %s30, %s21
      %p32 = scmp.ge.s32.totalorder %s31, 2
      %s33 = scalar_select %p32, 0, %s31
      %s34 = smul.u32 %s21, 3
      %s35 = sadd.s32 %s34, %s22
      %s36 = smul.u32 %s33, 3
      %s37 = sadd.s32 %s36, %s29
      %s38 = ssub.s32 %s35, %s37
      %p39 = scmp.eq.s32.totalorder %s38, 0
      %s41 = sadd.s32 %s40, 1
      %s42 = scalar_select %p39, %s40, %s41
      %p45 = pneg %p39
      %p46 = scmp.eq.s32.totalorder %s14, 5
      %p47 = por %p45, %p46
      %p48 = scmp.ne.s32.totalorder %s40, %s43
      %p49 = scmp.eq.s32.totalorder %s14, 0
      %p50 = por %p48, %p49
      %p51 = scmp.ne.s32.totalorder %s40, %s43
      %p52 = scmp.eq.s32.totalorder %s19, 5
      %p53 = por %p51, %p52
      %p54 = scmp.ne.s32.totalorder %s43, %s44
      %p55 = scmp.eq.s32.totalorder %s19, 0
      %p56 = por %p54, %p55
      %p57 = scmp.ne.s32.totalorder %s43, %s44
      %p58 = scmp.eq.s32.totalorder %s20, 5
      %p59 = por %p57, %p58
      %p61 = scmp.ne.s32.totalorder %s44, %s60
      %p62 = scmp.eq.s32.totalorder %s20, 0
      %p63 = por %p61, %p62
      %s64 = ssub.s32 %s21, %s33
      %p65 = scmp.eq.s32.totalorder %s64, 0
      %s67 = sadd.s32 %s66, 1
      %s68 = scalar_select %p65, %s66, %s67
      %p71 = pneg %p65
      %p72 = scmp.eq.s32.totalorder %s14, 5
      %p73 = por %p71, %p72
      %p74 = scmp.ne.s32.totalorder %s66, %s69
      %p75 = scmp.eq.s32.totalorder %s14, 0
      %p76 = por %p74, %p75
      %p77 = scmp.ne.s32.totalorder %s66, %s69
      %p78 = scmp.eq.s32.totalorder %s19, 5
      %p79 = por %p77, %p78
      %p80 = scmp.ne.s32.totalorder %s69, %s70
      %p81 = scmp.eq.s32.totalorder %s19, 0
      %p82 = por %p80, %p81
      %p83 = scmp.ne.s32.totalorder %s69, %s70
      %p84 = scmp.eq.s32.totalorder %s20, 5
      %p85 = por %p83, %p84
      %p87 = scmp.ne.s32.totalorder %s70, %s86
      %p88 = scmp.eq.s32.totalorder %s20, 0
      %p89 = por %p87, %p88
      %p90 = scmp.le.s32.totalorder 1, %s14
      %p91 = scmp.lt.s32.totalorder %s14, 7
      %p92 = pnand %p90, %p91
      %p93 = pneg %p92
      // Predicated region
      $region9: #{tpu_custom_call.1} parent=5 // pred_check
        _
      $region10: #{tpu_custom_call.1} parent=5 // pred_check_branch
        %95 = sbr.rel (%p92) target = $region12
      $region11: #{tpu_custom_call.1} parent=5 // pred_region
        %s96 = ssub.s32 %s14, 1
      $region12: #{tpu_custom_call.1} parent=5 // pred_fallthru
        _
      %p97 = scmp.lt.s32.totalorder %s14, 6
      // Predicated region
      $region13: #{tpu_custom_call.1} parent=5 // pred_check
        %p98 = pneg %p97
      $region14: #{tpu_custom_call.1} parent=5 // pred_check_branch
        %100 = sbr.rel (%p98) target = $region16
      $region15: #{tpu_custom_call.1} parent=5 // pred_region
        // Predicated region
        $region17: #{tpu_custom_call.1} parent=15 // pred_check
          %p101 = pneg %p50
        $region18: #{tpu_custom_call.1} parent=15 // pred_check_branch
          %103 = sbr.rel (%p101) target = $region20
        $region19: #{tpu_custom_call.1} parent=15 // pred_region
          %s104 = sand.u32 %s40, 1
          %s105 = scalar_lea.sflag [#allocation6], %s104
          %s106 = sand.u32 %s40, 1
          %s107 = smul.addr %s106, 4
          %s108 = scalar_lea.vmem [#allocation5], %s107
          %s109 = smul.u32 %s21, 3
          %s110 = sadd.s32 %s109, %s22
          %112 = vsyncadd %s105, 0
          %s113 = smul.addr %s110, 4
          %s114 = scalar_lea.hbm %s0, %s113
          %s116 = sshll.u32 %s114, 4
          %s117 = int_to_ptr.hbm [resolvable:$true] %s116
          %s118 = sshll.u32 %s108, 4
          %s119 = int_to_ptr.vmem [resolvable:$true] %s118
          %121 = dma.hbm_to_vmem [thread:$0]  %s117, 64, %s119, %s105
        $region20: #{tpu_custom_call.1} parent=15 // pred_fallthru
          _
      $region16: #{tpu_custom_call.1} parent=5 // pred_fallthru
        _
      %p122 = scmp.le.s32.totalorder 1, %s14
      %p123 = scmp.lt.s32.totalorder %s14, 7
      %p124 = pnand %p122, %p123
      %p125 = pneg %p124
      // Predicated region
      $region21: #{tpu_custom_call.1} parent=5 // pred_check
        _
      $region22: #{tpu_custom_call.1} parent=5 // pred_check_branch
        %127 = sbr.rel (%p124) target = $region24
      $region23: #{tpu_custom_call.1} parent=5 // pred_region
        %s128 = ssub.s32 %s14, 1
        %s129 = sand.u32 %s43, 1
        %s130 = scalar_lea.sflag [#allocation6], %s129
        %s131 = sand.u32 %s43, 1
        %s132 = smul.addr %s131, 4
        %s133 = scalar_lea.vmem [#allocation5], %s132
        // Predicated region
        $region25: #{tpu_custom_call.1} parent=23 // pred_check
          %p134 = pneg %p56
        $region26: #{tpu_custom_call.1} parent=23 // pred_check_branch
          %136 = sbr.rel (%p134) target = $region28
        $region27: #{tpu_custom_call.1} parent=23 // pred_region
          %138 = dma.done %s130, 64
        $region28: #{tpu_custom_call.1} parent=23 // pred_fallthru
          _
        %s139 = sand.u32 %s43, 1
        %s140 = scalar_lea.sflag [#allocation6], %s139
        %s141 = sand.u32 %s43, 1
        %s142 = smul.addr %s141, 4
        %s143 = scalar_lea.vmem [#allocation5], %s142
        %p144 = pneg %p56
        %p145 = pneg %p53
        %p146 = pneg %p82
        %p147 = pneg %p79
        %s148 = sand.u32 %s69, 1
        %s149 = scalar_lea.sflag [#allocation7], %s148
        %s150 = sand.u32 %s69, 1
        %s151 = scalar_lea.vmem [#allocation8], %s150
        %s152 = smul.u32 %s23, 3
        %s153 = sadd.s32 %s152, %s24
        %p154 = scmp.eq.s32.totalorder %s24, 0
        // Predicated region
        $region29: #{tpu_custom_call.1} parent=23 // pred_check
          %p155 = pneg %p154
        $region30: #{tpu_custom_call.1} parent=23 // pred_check_branch
          %157 = sbr.rel (%p155) target = $region32
        $region31: #{tpu_custom_call.1} parent=23 // pred_region
          $region33: #{tpu_custom_call.1} parent=31
            #allocation9 [shape = 's32[1]{0}', space=sflag, size = 0x4, scoped, tag = 'scoped memory for tpu_custom_call.1']
            // Predicated region
            $region34: #{tpu_custom_call.1} parent=33 // pred_check
              _
            $region35: #{tpu_custom_call.1} parent=33 // pred_check_branch
              %159 = sbr.rel target = $region37
            $region36: #{tpu_custom_call.1} parent=33 // pred_region
              %160 = sst [smem:[#allocation12]] [#allocation11]
              %161 = sst [smem:[#allocation13]] [#allocation10]
            $region37: #{tpu_custom_call.1} parent=33 // pred_fallthru
              _
            %163 = shalt.err (0)
            %s165 = sshll.u32 %s1, 4
            %s166 = int_to_ptr.hbm [resolvable:$true] %s165
            %s167 = sshll.u32 [#allocation2], 4
            %s168 = int_to_ptr.vmem [resolvable:$true] %s167
            %170 = dma.hbm_to_vmem [thread:$0]  %s166, 2048, %s168, [#allocation9]
            %s171 = smul.u32 128, 1
            %s172 = sshll.u32 %s171, 4
            %173 = dma.done [#allocation9], %s172
          %v174 = vld [vmem:[#allocation2] sm:$0xff]
          %v175 = vld [vmem:[#allocation2 + $0x8] sm:$0xff]
          %v176 = vld [vmem:[#allocation2 + $0x10] sm:$0xff]
          %v177 = vld [vmem:[#allocation2 + $0x18] sm:$0xff]
          %v178 = vld [vmem:[#allocation2 + $0x20] sm:$0xff]
          %v179 = vld [vmem:[#allocation2 + $0x28] sm:$0xff]
          %v180 = vld [vmem:[#allocation2 + $0x30] sm:$0xff]
          %v181 = vld [vmem:[#allocation2 + $0x38] sm:$0xff]
          %v182 = vld [vmem:[#allocation2 + $0x40] sm:$0xff]
          %v183 = vld [vmem:[#allocation2 + $0x48] sm:$0xff]
          %v184 = vld [vmem:[#allocation2 + $0x50] sm:$0xff]
          %v185 = vld [vmem:[#allocation2 + $0x58] sm:$0xff]
          %v186 = vld [vmem:[#allocation2 + $0x60] sm:$0xff]
          %v187 = vld [vmem:[#allocation2 + $0x68] sm:$0xff]
          %v188 = vld [vmem:[#allocation2 + $0x70] sm:$0xff]
          %v189 = vld [vmem:[#allocation2 + $0x78] sm:$0xff]
          %v190 = vmul.f32 %v174, %v174
          %v191 = vmul.f32 %v175, %v175
          %v192 = vmul.f32 %v176, %v176
          %v193 = vmul.f32 %v177, %v177
          %v194 = vmul.f32 %v178, %v178
          %v195 = vmul.f32 %v179, %v179
          %v196 = vmul.f32 %v180, %v180
          %v197 = vmul.f32 %v181, %v181
          %v198 = vmul.f32 %v182, %v182
          %v199 = vmul.f32 %v183, %v183
          %v200 = vmul.f32 %v184, %v184
          %v201 = vmul.f32 %v185, %v185
          %v202 = vmul.f32 %v186, %v186
          %v203 = vmul.f32 %v187, %v187
          %v204 = vmul.f32 %v188, %v188
          %v205 = vmul.f32 %v189, %v189
          %v206 = vadd.f32 %v190, %v191
          %v207 = vadd.f32 %v206, %v192
          %v208 = vadd.f32 %v207, %v193
          %v209 = vadd.f32 %v208, %v194
          %v210 = vadd.f32 %v209, %v195
          %v211 = vadd.f32 %v210, %v196
          %v212 = vadd.f32 %v211, %v197
          %v213 = vadd.f32 %v212, %v198
          %v214 = vadd.f32 %v213, %v199
          %v215 = vadd.f32 %v214, %v200
          %v216 = vadd.f32 %v215, %v201
          %v217 = vadd.f32 %v216, %v202
          %v218 = vadd.f32 %v217, %v203
          %v219 = vadd.f32 %v218, %v204
          %v220 = vadd.f32 %v219, %v205
          %v221 = vrot.slane %v220, 4
          %v222 = vadd.f32 %v220, %v221
          %v223 = vrot.slane %v222, 2
          %v224 = vadd.f32 %v222, %v223
          %v225 = vrot.slane %v224, 1
          %v226 = vadd.f32 %v224, %v225
          %227 = vst [vmem:[#allocation3] sm:$0xff] %v174
          %228 = vst [vmem:[#allocation3 + $0x8] sm:$0xff] %v175
          %229 = vst [vmem:[#allocation3 + $0x10] sm:$0xff] %v176
          %230 = vst [vmem:[#allocation3 + $0x18] sm:$0xff] %v177
          %231 = vst [vmem:[#allocation3 + $0x20] sm:$0xff] %v178
          %232 = vst [vmem:[#allocation3 + $0x28] sm:$0xff] %v179
          %233 = vst [vmem:[#allocation3 + $0x30] sm:$0xff] %v180
          %234 = vst [vmem:[#allocation3 + $0x38] sm:$0xff] %v181
          %235 = vst [vmem:[#allocation3 + $0x40] sm:$0xff] %v182
          %236 = vst [vmem:[#allocation3 + $0x48] sm:$0xff] %v183
          %237 = vst [vmem:[#allocation3 + $0x50] sm:$0xff] %v184
          %238 = vst [vmem:[#allocation3 + $0x58] sm:$0xff] %v185
          %239 = vst [vmem:[#allocation3 + $0x60] sm:$0xff] %v186
          %240 = vst [vmem:[#allocation3 + $0x68] sm:$0xff] %v187
          %241 = vst [vmem:[#allocation3 + $0x70] sm:$0xff] %v188
          %242 = vst [vmem:[#allocation3 + $0x78] sm:$0xff] %v189
          %v243 = vmul.f32 %v174, -2.0
          %v244 = vmul.f32 %v175, -2.0
          %v245 = vmul.f32 %v176, -2.0
          %v246 = vmul.f32 %v177, -2.0
          %v247 = vmul.f32 %v178, -2.0
          %v248 = vmul.f32 %v179, -2.0
          %v249 = vmul.f32 %v180, -2.0
          %v250 = vmul.f32 %v181, -2.0
          %v251 = vmul.f32 %v182, -2.0
          %v252 = vmul.f32 %v183, -2.0
          %v253 = vmul.f32 %v184, -2.0
          %v254 = vmul.f32 %v185, -2.0
          %v255 = vmul.f32 %v186, -2.0
          %v256 = vmul.f32 %v187, -2.0
          %v257 = vmul.f32 %v188, -2.0
          %v258 = vmul.f32 %v189, -2.0
          %259 = vst [vmem:[#allocation4] sm:$0xff] %v243
          %260 = vst [vmem:[#allocation4 + $0x8] sm:$0xff] %v244
          %261 = vst [vmem:[#allocation4 + $0x10] sm:$0xff] %v245
          %262 = vst [vmem:[#allocation4 + $0x18] sm:$0xff] %v246
          %263 = vst [vmem:[#allocation4 + $0x20] sm:$0xff] %v247
          %264 = vst [vmem:[#allocation4 + $0x28] sm:$0xff] %v248
          %265 = vst [vmem:[#allocation4 + $0x30] sm:$0xff] %v249
          %266 = vst [vmem:[#allocation4 + $0x38] sm:$0xff] %v250
          %267 = vst [vmem:[#allocation4 + $0x40] sm:$0xff] %v251
          %268 = vst [vmem:[#allocation4 + $0x48] sm:$0xff] %v252
          %269 = vst [vmem:[#allocation4 + $0x50] sm:$0xff] %v253
          %270 = vst [vmem:[#allocation4 + $0x58] sm:$0xff] %v254
          %271 = vst [vmem:[#allocation4 + $0x60] sm:$0xff] %v255
          %272 = vst [vmem:[#allocation4 + $0x68] sm:$0xff] %v256
          %273 = vst [vmem:[#allocation4 + $0x70] sm:$0xff] %v257
          %274 = vst [vmem:[#allocation4 + $0x78] sm:$0xff] %v258
          %v275 = vlaneseq
          %v276 = vshrl.u32 %v275, 7
          %vm277 = vcmp.eq.s32.totalorder %v276, 0
          %v278 = vsel %vm277, 1, 0
          %v279 = vcvt.s32.f32 %v278
          %280 = vst [vmem:[#allocation3 + $0x80] sm:$0xff] %v279
          %v281 = vsel %vm277, %v226, 0.0
          %282 = vst [vmem:[#allocation4 + $0x80] sm:$0xff] %v281
          %283 = vst [vmem:[%s151] sm:$0x1] 0.0
        $region32: #{tpu_custom_call.1} parent=23 // pred_fallthru
          _
        %v284 = vlaneseq
        %v285 = vshrl.u32 %v284, 7
        %v286 = vadd.s32 %v285, 8
        %v287 = vadd.s32 %v285, 16
        %v288 = vadd.s32 %v285, 24
        %v289 = vadd.s32 %v285, 32
        %v290 = vadd.s32 %v285, 40
        %v291 = vadd.s32 %v285, 48
        %v292 = vadd.s32 %v285, 56
        %v293 = vadd.s32 %v285, 64
        %v294 = vadd.s32 %v285, 72
        %v295 = vadd.s32 %v285, 80
        %v296 = vadd.s32 %v285, 88
        %v297 = vadd.s32 %v285, 96
        %v298 = vadd.s32 %v285, 104
        %v299 = vadd.s32 %v285, 112
        %v300 = vadd.s32 %v285, 120
        %v301 = vld [vmem:[%s133] sm:$0x1]
        %v302 = vperm.slane %v301, 0
        %vm303 = vcmp.eq.s32.totalorder %v285, %v302
        %vm304 = vcmp.eq.s32.totalorder %v286, %v302
        %vm305 = vcmp.eq.s32.totalorder %v287, %v302
        %vm306 = vcmp.eq.s32.totalorder %v288, %v302
        %vm307 = vcmp.eq.s32.totalorder %v289, %v302
        %vm308 = vcmp.eq.s32.totalorder %v290, %v302
        %vm309 = vcmp.eq.s32.totalorder %v291, %v302
        %vm310 = vcmp.eq.s32.totalorder %v292, %v302
        %vm311 = vcmp.eq.s32.totalorder %v293, %v302
        %vm312 = vcmp.eq.s32.totalorder %v294, %v302
        %vm313 = vcmp.eq.s32.totalorder %v295, %v302
        %vm314 = vcmp.eq.s32.totalorder %v296, %v302
        %vm315 = vcmp.eq.s32.totalorder %v297, %v302
        %vm316 = vcmp.eq.s32.totalorder %v298, %v302
        %vm317 = vcmp.eq.s32.totalorder %v299, %v302
        %vm318 = vcmp.eq.s32.totalorder %v300, %v302
        %v319 = vsel %vm303, 1, 0
        %v320 = vsel %vm304, 1, 0
        %v321 = vsel %vm305, 1, 0
        %v322 = vsel %vm306, 1, 0
        %v323 = vsel %vm307, 1, 0
        %v324 = vsel %vm308, 1, 0
        %v325 = vsel %vm309, 1, 0
        %v326 = vsel %vm310, 1, 0
        %v327 = vsel %vm311, 1, 0
        %v328 = vsel %vm312, 1, 0
        %v329 = vsel %vm313, 1, 0
        %v330 = vsel %vm314, 1, 0
        %v331 = vsel %vm315, 1, 0
        %v332 = vsel %vm316, 1, 0
        %v333 = vsel %vm317, 1, 0
        %v334 = vsel %vm318, 1, 0
        %v335 = vcvt.s32.f32 %v319
        %v336 = vcvt.s32.f32 %v320
        %v337 = vcvt.s32.f32 %v321
        %v338 = vcvt.s32.f32 %v322
        %v339 = vcvt.s32.f32 %v323
        %v340 = vcvt.s32.f32 %v324
        %v341 = vcvt.s32.f32 %v325
        %v342 = vcvt.s32.f32 %v326
        %v343 = vcvt.s32.f32 %v327
        %v344 = vcvt.s32.f32 %v328
        %v345 = vcvt.s32.f32 %v329
        %v346 = vcvt.s32.f32 %v330
        %v347 = vcvt.s32.f32 %v331
        %v348 = vcvt.s32.f32 %v332
        %v349 = vcvt.s32.f32 %v333
        %v350 = vcvt.s32.f32 %v334
        %v351 = vld [vmem:[%s133 + $0x1] sm:$0x1]
        %v352 = vperm.slane %v351, 0
        %vm353 = vcmp.eq.s32.totalorder %v285, %v352
        %vm354 = vcmp.eq.s32.totalorder %v286, %v352
        %vm355 = vcmp.eq.s32.totalorder %v287, %v352
        %vm356 = vcmp.eq.s32.totalorder %v288, %v352
        %vm357 = vcmp.eq.s32.totalorder %v289, %v352
        %vm358 = vcmp.eq.s32.totalorder %v290, %v352
        %vm359 = vcmp.eq.s32.totalorder %v291, %v352
        %vm360 = vcmp.eq.s32.totalorder %v292, %v352
        %vm361 = vcmp.eq.s32.totalorder %v293, %v352
        %vm362 = vcmp.eq.s32.totalorder %v294, %v352
        %vm363 = vcmp.eq.s32.totalorder %v295, %v352
        %vm364 = vcmp.eq.s32.totalorder %v296, %v352
        %vm365 = vcmp.eq.s32.totalorder %v297, %v352
        %vm366 = vcmp.eq.s32.totalorder %v298, %v352
        %vm367 = vcmp.eq.s32.totalorder %v299, %v352
        %vm368 = vcmp.eq.s32.totalorder %v300, %v352
        %v369 = vsel %vm353, 1, 0
        %v370 = vsel %vm354, 1, 0
        %v371 = vsel %vm355, 1, 0
        %v372 = vsel %vm356, 1, 0
        %v373 = vsel %vm357, 1, 0
        %v374 = vsel %vm358, 1, 0
        %v375 = vsel %vm359, 1, 0
        %v376 = vsel %vm360, 1, 0
        %v377 = vsel %vm361, 1, 0
        %v378 = vsel %vm362, 1, 0
        %v379 = vsel %vm363, 1, 0
        %v380 = vsel %vm364, 1, 0
        %v381 = vsel %vm365, 1, 0
        %v382 = vsel %vm366, 1, 0
        %v383 = vsel %vm367, 1, 0
        %v384 = vsel %vm368, 1, 0
        %v385 = vcvt.s32.f32 %v369
        %v386 = vcvt.s32.f32 %v370
        %v387 = vcvt.s32.f32 %v371
        %v388 = vcvt.s32.f32 %v372
        %v389 = vcvt.s32.f32 %v373
        %v390 = vcvt.s32.f32 %v374
        %v391 = vcvt.s32.f32 %v375
        %v392 = vcvt.s32.f32 %v376
        %v393 = vcvt.s32.f32 %v377
        %v394 = vcvt.s32.f32 %v378
        %v395 = vcvt.s32.f32 %v379
        %v396 = vcvt.s32.f32 %v380
        %v397 = vcvt.s32.f32 %v381
        %v398 = vcvt.s32.f32 %v382
        %v399 = vcvt.s32.f32 %v383
        %v400 = vcvt.s32.f32 %v384
        %v401 = vld [vmem:[%s133 + $0x2] sm:$0x1]
        %v402 = vperm.slane %v401, 0
        %vm403 = vcmp.eq.s32.totalorder %v285, %v402
        %vm404 = vcmp.eq.s32.totalorder %v286, %v402
        %vm405 = vcmp.eq.s32.totalorder %v287, %v402
        %vm406 = vcmp.eq.s32.totalorder %v288, %v402
        %vm407 = vcmp.eq.s32.totalorder %v289, %v402
        %vm408 = vcmp.eq.s32.totalorder %v290, %v402
        %vm409 = vcmp.eq.s32.totalorder %v291, %v402
        %vm410 = vcmp.eq.s32.totalorder %v292, %v402
        %vm411 = vcmp.eq.s32.totalorder %v293, %v402
        %vm412 = vcmp.eq.s32.totalorder %v294, %v402
        %vm413 = vcmp.eq.s32.totalorder %v295, %v402
        %vm414 = vcmp.eq.s32.totalorder %v296, %v402
        %vm415 = vcmp.eq.s32.totalorder %v297, %v402
        %vm416 = vcmp.eq.s32.totalorder %v298, %v402
        %vm417 = vcmp.eq.s32.totalorder %v299, %v402
        %vm418 = vcmp.eq.s32.totalorder %v300, %v402
        %v419 = vsel %vm403, 1, 0
        %v420 = vsel %vm404, 1, 0
        %v421 = vsel %vm405, 1, 0
        %v422 = vsel %vm406, 1, 0
        %v423 = vsel %vm407, 1, 0
        %v424 = vsel %vm408, 1, 0
        %v425 = vsel %vm409, 1, 0
        %v426 = vsel %vm410, 1, 0
        %v427 = vsel %vm411, 1, 0
        %v428 = vsel %vm412, 1, 0
        %v429 = vsel %vm413, 1, 0
        %v430 = vsel %vm414, 1, 0
        %v431 = vsel %vm415, 1, 0
        %v432 = vsel %vm416, 1, 0
        %v433 = vsel %vm417, 1, 0
        %v434 = vsel %vm418, 1, 0
        %v435 = vcvt.s32.f32 %v419
        %v436 = vcvt.s32.f32 %v420
        %v437 = vcvt.s32.f32 %v421
        %v438 = vcvt.s32.f32 %v422
        %v439 = vcvt.s32.f32 %v423
        %v440 = vcvt.s32.f32 %v424
        %v441 = vcvt.s32.f32 %v425
        %v442 = vcvt.s32.f32 %v426
        %v443 = vcvt.s32.f32 %v427
        %v444 = vcvt.s32.f32 %v428
        %v445 = vcvt.s32.f32 %v429
        %v446 = vcvt.s32.f32 %v430
        %v447 = vcvt.s32.f32 %v431
        %v448 = vcvt.s32.f32 %v432
        %v449 = vcvt.s32.f32 %v433
        %v450 = vcvt.s32.f32 %v434
        %v451 = vsub.f32 %v385, %v435
        %v452 = vsub.f32 %v386, %v436
        %v453 = vsub.f32 %v387, %v437
        %v454 = vsub.f32 %v388, %v438
        %v455 = vsub.f32 %v389, %v439
        %v456 = vsub.f32 %v390, %v440
        %v457 = vsub.f32 %v391, %v441
        %v458 = vsub.f32 %v392, %v442
        %v459 = vsub.f32 %v393, %v443
        %v460 = vsub.f32 %v394, %v444
        %v461 = vsub.f32 %v395, %v445
        %v462 = vsub.f32 %v396, %v446
        %v463 = vsub.f32 %v397, %v447
        %v464 = vsub.f32 %v398, %v448
        %v465 = vsub.f32 %v399, %v449
        %v466 = vsub.f32 %v400, %v450
        %v467 = vld [vmem:[#allocation3] sm:$0xff]
        %v468 = vld [vmem:[#allocation3 + $0x8] sm:$0xff]
        %v469 = vld [vmem:[#allocation3 + $0x10] sm:$0xff]
        %v470 = vld [vmem:[#allocation3 + $0x18] sm:$0xff]
        %v471 = vld [vmem:[#allocation3 + $0x20] sm:$0xff]
        %v472 = vld [vmem:[#allocation3 + $0x28] sm:$0xff]
        %v473 = vld [vmem:[#allocation3 + $0x30] sm:$0xff]
        %v474 = vld [vmem:[#allocation3 + $0x38] sm:$0xff]
        %v475 = vld [vmem:[#allocation3 + $0x40] sm:$0xff]
        %v476 = vld [vmem:[#allocation3 + $0x48] sm:$0xff]
        %v477 = vld [vmem:[#allocation3 + $0x50] sm:$0xff]
        %v478 = vld [vmem:[#allocation3 + $0x58] sm:$0xff]
        %v479 = vld [vmem:[#allocation3 + $0x60] sm:$0xff]
        %v480 = vld [vmem:[#allocation3 + $0x68] sm:$0xff]
        %v481 = vld [vmem:[#allocation3 + $0x70] sm:$0xff]
        %v482 = vld [vmem:[#allocation3 + $0x78] sm:$0xff]
        %v483 = vld [vmem:[#allocation3 + $0x80] sm:$0xff]
        %484 = vmatpush.msra.mxu0 %v350
        %485 = vmatpush.msra.mxu0 %v349
        %486 = vmatpush.msra.mxu0 %v348
        %487 = vmatpush.msra.mxu0 %v347
        %488 = vmatpush.msra.mxu0 %v346
        %489 = vmatpush.msra.mxu0 %v345
        %490 = vmatpush.msra.mxu0 %v344
        %491 = vmatpush.msra.mxu0 %v343
        %492 = vmatpush.msra.mxu0 %v342
        %493 = vmatpush.msra.mxu0 %v341
        %494 = vmatpush.msra.mxu0 %v340
        %495 = vmatpush.msra.mxu0 %v339
        %496 = vmatpush.msra.mxu0 %v338
        %497 = vmatpush.msra.mxu0 %v337
        %498 = vmatpush.msra.mxu0 %v336
        %499 = vmatpush.msra.mxu0 %v335
        %500 = vmatmul.f32.gmra.mxu0 %v467
        %v501 = vpop.f32.mrf.mxu0
        %v502 = vadd.f32 0.0, %v501
        %503 = vmatmul.f32.gmra.mxu0 %v468
        %v504 = vpop.f32.mrf.mxu0
        %v505 = vadd.f32 0.0, %v504
        %506 = vmatmul.f32.gmra.mxu0 %v469
        %v507 = vpop.f32.mrf.mxu0
        %v508 = vadd.f32 0.0, %v507
        %509 = vmatmul.f32.gmra.mxu0 %v470
        %v510 = vpop.f32.mrf.mxu0
        %v511 = vadd.f32 0.0, %v510
        %512 = vmatmul.f32.gmra.mxu0 %v471
        %v513 = vpop.f32.mrf.mxu0
        %v514 = vadd.f32 0.0, %v513
        %515 = vmatmul.f32.gmra.mxu0 %v472
        %v516 = vpop.f32.mrf.mxu0
        %v517 = vadd.f32 0.0, %v516
        %518 = vmatmul.f32.gmra.mxu0 %v473
        %v519 = vpop.f32.mrf.mxu0
        %v520 = vadd.f32 0.0, %v519
        %521 = vmatmul.f32.gmra.mxu0 %v474
        %v522 = vpop.f32.mrf.mxu0
        %v523 = vadd.f32 0.0, %v522
        %524 = vmatmul.f32.gmra.mxu0 %v475
        %v525 = vpop.f32.mrf.mxu0
        %v526 = vadd.f32 0.0, %v525
        %527 = vmatmul.f32.gmra.mxu0 %v476
        %v528 = vpop.f32.mrf.mxu0
        %v529 = vadd.f32 0.0, %v528
        %530 = vmatmul.f32.gmra.mxu0 %v477
        %v531 = vpop.f32.mrf.mxu0
        %v532 = vadd.f32 0.0, %v531
        %533 = vmatmul.f32.gmra.mxu0 %v478
        %v534 = vpop.f32.mrf.mxu0
        %v535 = vadd.f32 0.0, %v534
        %536 = vmatmul.f32.gmra.mxu0 %v479
        %v537 = vpop.f32.mrf.mxu0
        %v538 = vadd.f32 0.0, %v537
        %539 = vmatmul.f32.gmra.mxu0 %v480
        %v540 = vpop.f32.mrf.mxu0
        %v541 = vadd.f32 0.0, %v540
        %542 = vmatmul.f32.gmra.mxu0 %v481
        %v543 = vpop.f32.mrf.mxu0
        %v544 = vadd.f32 0.0, %v543
        %545 = vmatmul.f32.gmra.mxu0 %v482
        %v546 = vpop.f32.mrf.mxu0
        %v547 = vadd.f32 0.0, %v546
        %548 = vmatmul.f32.gmra.mxu0 %v483
        %v549 = vpop.f32.mrf.mxu0
        %v550 = vadd.f32 0.0, %v549
        %551 = vdwg.mxu0
        %v552 = vld [vmem:[#allocation4] sm:$0xff]
        %v553 = vld [vmem:[#allocation4 + $0x8] sm:$0xff]
        %v554 = vld [vmem:[#allocation4 + $0x10] sm:$0xff]
        %v555 = vld [vmem:[#allocation4 + $0x18] sm:$0xff]
        %v556 = vld [vmem:[#allocation4 + $0x20] sm:$0xff]
        %v557 = vld [vmem:[#allocation4 + $0x28] sm:$0xff]
        %v558 = vld [vmem:[#allocation4 + $0x30] sm:$0xff]
        %v559 = vld [vmem:[#allocation4 + $0x38] sm:$0xff]
        %v560 = vld [vmem:[#allocation4 + $0x40] sm:$0xff]
        %v561 = vld [vmem:[#allocation4 + $0x48] sm:$0xff]
        %v562 = vld [vmem:[#allocation4 + $0x50] sm:$0xff]
        %v563 = vld [vmem:[#allocation4 + $0x58] sm:$0xff]
        %v564 = vld [vmem:[#allocation4 + $0x60] sm:$0xff]
        %v565 = vld [vmem:[#allocation4 + $0x68] sm:$0xff]
        %v566 = vld [vmem:[#allocation4 + $0x70] sm:$0xff]
        %v567 = vld [vmem:[#allocation4 + $0x78] sm:$0xff]
        %v568 = vld [vmem:[#allocation4 + $0x80] sm:$0xff]
        %569 = vmatpush.msra.mxu0 %v466
        %570 = vmatpush.msra.mxu0 %v465
        %571 = vmatpush.msra.mxu0 %v464
        %572 = vmatpush.msra.mxu0 %v463
        %573 = vmatpush.msra.mxu0 %v462
        %574 = vmatpush.msra.mxu0 %v461
        %575 = vmatpush.msra.mxu0 %v460
        %576 = vmatpush.msra.mxu0 %v459
        %577 = vmatpush.msra.mxu0 %v458
        %578 = vmatpush.msra.mxu0 %v457
        %579 = vmatpush.msra.mxu0 %v456
        %580 = vmatpush.msra.mxu0 %v455
        %581 = vmatpush.msra.mxu0 %v454
        %582 = vmatpush.msra.mxu0 %v453
        %583 = vmatpush.msra.mxu0 %v452
        %584 = vmatpush.msra.mxu0 %v451
        %585 = vmatmul.f32.gmra.mxu0 %v552
        %v586 = vpop.f32.mrf.mxu0
        %v587 = vadd.f32 0.0, %v586
        %588 = vmatmul.f32.gmra.mxu0 %v553
        %v589 = vpop.f32.mrf.mxu0
        %v590 = vadd.f32 0.0, %v589
        %591 = vmatmul.f32.gmra.mxu0 %v554
        %v592 = vpop.f32.mrf.mxu0
        %v593 = vadd.f32 0.0, %v592
        %594 = vmatmul.f32.gmra.mxu0 %v555
        %v595 = vpop.f32.mrf.mxu0
        %v596 = vadd.f32 0.0, %v595
        %597 = vmatmul.f32.gmra.mxu0 %v556
        %v598 = vpop.f32.mrf.mxu0
        %v599 = vadd.f32 0.0, %v598
        %600 = vmatmul.f32.gmra.mxu0 %v557
        %v601 = vpop.f32.mrf.mxu0
        %v602 = vadd.f32 0.0, %v601
        %603 = vmatmul.f32.gmra.mxu0 %v558
        %v604 = vpop.f32.mrf.mxu0
        %v605 = vadd.f32 0.0, %v604
        %606 = vmatmul.f32.gmra.mxu0 %v559
        %v607 = vpop.f32.mrf.mxu0
        %v608 = vadd.f32 0.0, %v607
        %609 = vmatmul.f32.gmra.mxu0 %v560
        %v610 = vpop.f32.mrf.mxu0
        %v611 = vadd.f32 0.0, %v610
        %612 = vmatmul.f32.gmra.mxu0 %v561
        %v613 = vpop.f32.mrf.mxu0
        %v614 = vadd.f32 0.0, %v613
        %615 = vmatmul.f32.gmra.mxu0 %v562
        %v616 = vpop.f32.mrf.mxu0
        %v617 = vadd.f32 0.0, %v616
        %618 = vmatmul.f32.gmra.mxu0 %v563
        %v619 = vpop.f32.mrf.mxu0
        %v620 = vadd.f32 0.0, %v619
        %621 = vmatmul.f32.gmra.mxu0 %v564
        %v622 = vpop.f32.mrf.mxu0
        %v623 = vadd.f32 0.0, %v622
        %624 = vmatmul.f32.gmra.mxu0 %v565
        %v625 = vpop.f32.mrf.mxu0
        %v626 = vadd.f32 0.0, %v625
        %627 = vmatmul.f32.gmra.mxu0 %v566
        %v628 = vpop.f32.mrf.mxu0
        %v629 = vadd.f32 0.0, %v628
        %630 = vmatmul.f32.gmra.mxu0 %v567
        %v631 = vpop.f32.mrf.mxu0
        %v632 = vadd.f32 0.0, %v631
        %633 = vmatmul.f32.gmra.mxu0 %v568
        %v634 = vpop.f32.mrf.mxu0
        %v635 = vadd.f32 0.0, %v634
        %636 = vdwg.mxu0
        %v637 = vmul.f32 %v502, %v587
        %v638 = vmul.f32 %v505, %v590
        %v639 = vmul.f32 %v508, %v593
        %v640 = vmul.f32 %v511, %v596
        %v641 = vmul.f32 %v514, %v599
        %v642 = vmul.f32 %v517, %v602
        %v643 = vmul.f32 %v520, %v605
        %v644 = vmul.f32 %v523, %v608
        %v645 = vmul.f32 %v526, %v611
        %v646 = vmul.f32 %v529, %v614
        %v647 = vmul.f32 %v532, %v617
        %v648 = vmul.f32 %v535, %v620
        %v649 = vmul.f32 %v538, %v623
        %v650 = vmul.f32 %v541, %v626
        %v651 = vmul.f32 %v544, %v629
        %v652 = vmul.f32 %v547, %v632
        %v653 = vmul.f32 %v550, %v635
        %v654 = vadd.f32 %v637, %v638
        %v655 = vadd.f32 %v654, %v639
        %v656 = vadd.f32 %v655, %v640
        %v657 = vadd.f32 %v656, %v641
        %v658 = vadd.f32 %v657, %v642
        %v659 = vadd.f32 %v658, %v643
        %v660 = vadd.f32 %v659, %v644
        %v661 = vadd.f32 %v660, %v645
        %v662 = vadd.f32 %v661, %v646
        %v663 = vadd.f32 %v662, %v647
        %v664 = vadd.f32 %v663, %v648
        %v665 = vadd.f32 %v664, %v649
        %v666 = vadd.f32 %v665, %v650
        %v667 = vadd.f32 %v666, %v651
        %v668 = vadd.f32 %v667, %v652
        %v669 = vadd.f32 %v668, %v653
        %v670 = vrot.slane %v669, 4
        %v671 = vadd.f32 %v669, %v670
        %v672 = vrot.slane %v671, 2
        %v673 = vadd.f32 %v671, %v672
        %v674 = vrot.slane %v673, 1
        %v675 = vadd.f32 %v673, %v674
        %v676 = vld [vmem:[%s151] sm:$0x1]
        %v677 = vadd.f32 %v675, 1.0
        %v678 = vmax.f32 %v677, 0.0
        %v679 = vadd.f32 %v676, %v678
        %680 = vst [vmem:[%s151] sm:$0x1] %v679
        %s681 = sand.u32 %s69, 1
        %s682 = scalar_lea.sflag [#allocation7], %s681
        %s683 = sand.u32 %s69, 1
        %s684 = scalar_lea.vmem [#allocation8], %s683
        // Predicated region
        $region38: #{tpu_custom_call.1} parent=23 // pred_check
          %p685 = pneg %p79
        $region39: #{tpu_custom_call.1} parent=23 // pred_check_branch
          %687 = sbr.rel (%p685) target = $region41
        $region40: #{tpu_custom_call.1} parent=23 // pred_region
          %689 = vsyncadd %s682, 0
          %s690 = scalar_lea.hbm %s2, %s23
          %s692 = sshll.u32 %s684, 4
          %s693 = int_to_ptr.vmem [resolvable:$true] %s692
          %s694 = sshll.u32 %s690, 4
          %s695 = int_to_ptr.hbm [resolvable:$true] %s694
          %697 = dma.vmem_to_hbm [thread:$0]  %s693, 16, %s695, %s682
        $region41: #{tpu_custom_call.1} parent=23 // pred_fallthru
          _
      $region24: #{tpu_custom_call.1} parent=5 // pred_fallthru
        _
      %p698 = scmp.le.s32.totalorder 2, %s14
      // Predicated region
      $region42: #{tpu_custom_call.1} parent=5 // pred_check
        %p699 = pneg %p698
      $region43: #{tpu_custom_call.1} parent=5 // pred_check_branch
        %701 = sbr.rel (%p699) target = $region45
      $region44: #{tpu_custom_call.1} parent=5 // pred_region
        %s702 = ssub.s32 %s14, 2
        // Predicated region
        $region46: #{tpu_custom_call.1} parent=44 // pred_check
          %p703 = pneg %p85
        $region47: #{tpu_custom_call.1} parent=44 // pred_check_branch
          %705 = sbr.rel (%p703) target = $region49
        $region48: #{tpu_custom_call.1} parent=44 // pred_region
          %s706 = sand.u32 %s70, 1
          %s707 = scalar_lea.sflag [#allocation7], %s706
          %s708 = sand.u32 %s70, 1
          %s709 = scalar_lea.vmem [#allocation8], %s708
          %711 = dma.done %s707, 16
        $region49: #{tpu_custom_call.1} parent=44 // pred_fallthru
          _
      $region45: #{tpu_custom_call.1} parent=5 // pred_fallthru
        _
    $region6: #{tpu_custom_call.1} parent=1 // loop_footer
      %s18 = sadd.s32 1, %s14
    $region7: #{tpu_custom_call.1} parent=1 // loop_footer_branch
      %13 = sbr.rel target = $region3
    $region8: #{tpu_custom_call.1} parent=1 // loop_exit
      _
    %712 = vsyncpa [#allocation6], 1
    %s713 = scalar_lea.sflag [#allocation6], 1
    %714 = vsyncpa %s713, 1
    %715 = vsyncpa [#allocation7], 1
    %s716 = scalar_lea.sflag [#allocation7], 1
    %717 = vsyncpa %s716, 1

</llo_original>
